<compile_context>
chip_gen: v7x
topology: tpu7x:2x2x1
jax: 0.10.0
libtpu: 0.0.40
codegen_flags: <defaults>
</compile_context>

<pallas_src>
import functools
import numpy as np
import jax
import jax.numpy as jnp
from jax.experimental import pallas as pl
from jax.experimental.pallas import tpu as pltpu


def _round_up(x, m):
    return ((x + m - 1) // m) * m


# ---------------------------------------------------------------------------
# Pallas kernel: conv_x -> ReLU -> BN -> conv_h -> ReLU -> BN -> fc -> ReLU
#                -> BN -> fused (Q|K) -> masked softmax(QK^T / n_hid) -> sym
# ---------------------------------------------------------------------------
def _gts_kernel(n_hid, n_nodes, np_cols,
                x_ref, wgx_ref, bx_ref, p1_ref,
                wgh_ref, bh_ref, p2_ref,
                wfc_ref, bfc_ref, wqk_ref, bqk_ref,
                out_ref):
    eps = jnp.float32(1e-5)
    f32 = jnp.float32
    bf16 = jnp.bfloat16

    def bn_channels(y, p_ref):
        # Per-channel training-mode BatchNorm: stacked [sum; sum_sq] stats go
        # through ONE block-diagonal averaging matmul (P = G @ B, f32).
        st = jnp.concatenate(
            [jnp.sum(y, axis=0, keepdims=True),
             jnp.sum(y * y, axis=0, keepdims=True)], axis=0)          # (2, Mp)
        stb = jnp.dot(st, p_ref[...], preferred_element_type=f32)     # (2, Mp)
        m = stb[0:1, :]
        v = stb[1:2, :] - m * m
        return (y - m) * jax.lax.rsqrt(v + eps)

    x = x_ref[...].astype(bf16)                                        # (N, T)

    # conv_x (im2col folded, lane-padded cols) + bias + ReLU + BN(channel)
    y1 = jnp.maximum(
        jnp.dot(x, wgx_ref[...], preferred_element_type=f32) + bx_ref[...], 0.0)
    z1 = bn_channels(y1, p1_ref)

    # conv_h (im2col folded, lane-padded cols) + bias + ReLU + BN(channel)
    y2 = jnp.maximum(
        jnp.dot(z1.astype(bf16), wgh_ref[...], preferred_element_type=f32)
        + bh_ref[...], 0.0)
    z2 = bn_channels(y2, p2_ref)

    # fc_conv_h + ReLU + BatchNorm1d(n_hid) over nodes (un-padded n_hid cols,
    # so downstream contractions run over the real hidden width only)
    y3 = jnp.maximum(
        jnp.dot(z2.astype(bf16), wfc_ref[...], preferred_element_type=f32)
        + bfc_ref[...], 0.0)
    inv_n = jnp.float32(1.0 / n_nodes)
    m3 = jnp.sum(y3, axis=0, keepdims=True) * inv_n
    v3 = jnp.sum(y3 * y3, axis=0, keepdims=True) * inv_n - m3 * m3
    z3 = (y3 - m3) * jax.lax.rsqrt(v3 + eps)                          # (N, n_hid)

    # fused Q|K projection (Q cols [0,n_hid), K cols [n_hid,2*n_hid)),
    # contraction over exactly n_hid.
    qk = (jnp.dot(z3.astype(bf16), wqk_ref[...], preferred_element_type=f32)
          + bqk_ref[...])                                             # (N, 2*n_hid)
    q = qk[:, :n_hid]
    k = qk[:, n_hid:]

    # Pad K rows to np_cols so scores / softmax / output are lane-dense.
    if np_cols > n_nodes:
        k = jnp.concatenate(
            [k, jnp.zeros((np_cols - n_nodes, n_hid), f32)], axis=0)  # (Np, n_hid)

    # scores: contract on the hidden dim of both (no explicit transpose)
    s = jax.lax.dot_general(q.astype(bf16), k.astype(bf16),
                            (((1,), (1,)), ((), ())),
                            preferred_element_type=f32)               # (N, Np)
    s = s * jnp.float32(1.0 / n_hid)

    # column-masked, numerically-stable softmax (padded key columns removed)
    if np_cols > n_nodes:
        col = jax.lax.broadcasted_iota(jnp.int32, s.shape, 1)
        valid = col < n_nodes
        mrow = jnp.max(jnp.where(valid, s, -jnp.inf), axis=1, keepdims=True)
        e = jnp.where(valid, jnp.exp(s - mrow), 0.0)
    else:
        mrow = jnp.max(s, axis=1, keepdims=True)
        e = jnp.exp(s - mrow)
    a = e * pl.reciprocal(jnp.sum(e, axis=1, keepdims=True), approx=True)

    # Symmetrize on a fully padded square so the store is one dense slab; the
    # padded rows/cols are exactly zero and get sliced off in the wrapper.
    if np_cols > n_nodes:
        a = jnp.concatenate(
            [a, jnp.zeros((np_cols - n_nodes, np_cols), f32)], axis=0)
    out_ref[...] = 0.5 * (a + jnp.transpose(a))


def gts_adj_dense_pallas(x2d, folded, n_hid):
    """Dense symmetric adjacency (N, N) computed in one fused Pallas kernel."""
    n_nodes = x2d.shape[0]
    np_cols = _round_up(n_nodes, 128)   # lane-dense score/softmax/output width
    operands = (x2d,
                folded['wgx'], folded['bx'], folded['p1'],
                folded['wgh'], folded['bh'], folded['p2'],
                folded['wfc'], folded['bfc'],
                folded['wqk'], folded['bqk'])
    kernel = functools.partial(_gts_kernel, n_hid, n_nodes, np_cols)
    vmem_spec = pl.BlockSpec(memory_space=pltpu.MemorySpace.VMEM)

    # Rough VMEM footprint; only raise the scoped limit when the conservative
    # defaults (16 MiB on v5e, 32 MiB on v6e/v7x) would be too small.
    est = sum(int(np.prod(o.shape)) * o.dtype.itemsize for o in operands)
    est += 6 * np_cols * np_cols * 4          # s / e / a / out f32 temporaries
    compiler_params = None
    if est > 12 * 1024 * 1024:
        compiler_params = pltpu.CompilerParams(
            vmem_limit_bytes=min(2 * est, 48 * 1024 * 1024))

    dense_p = pl.pallas_call(
        kernel,
        out_shape=jax.ShapeDtypeStruct((np_cols, np_cols), jnp.float32),
        in_specs=[vmem_spec] * len(operands),
        out_specs=vmem_spec,
        compiler_params=compiler_params,
    )(*operands)
    return dense_p[:n_nodes, :n_nodes]


# ---------------------------------------------------------------------------
# Glue: parameter setup (conv im2col folding, folded BN matrices, bf16 weights)
# ---------------------------------------------------------------------------
def _fold_conv1d(w, b, l_in, stride, in_rows, out_cols):
    """w: (O, C, K) conv1d weight -> dense (in_rows, out_cols) matmul weight.

    Row layout is channel-major (c * l_in + t); column layout is channel-major
    (o * l_out + l).  Extra rows/cols beyond the real extents stay zero."""
    w = np.asarray(w, np.float32)
    b = np.asarray(b, np.float32)
    o_ch, c_ch, k_sz = w.shape
    l_out = (l_in - k_sz) // stride + 1
    wf = np.zeros((in_rows, out_cols), np.float32)
    bf = np.zeros((1, out_cols), np.float32)
    for o in range(o_ch):
        for c in range(c_ch):
            for l in range(l_out):
                for k in range(k_sz):
                    wf[c * l_in + l * stride + k, o * l_out + l] = w[o, c, k]
    bf[0, :o_ch * l_out] = np.repeat(b, l_out)
    return wf, bf, l_out


def _bn_fold_matrix(n_channels, length, n_batch, m_pad):
    """Block-diagonal P = G @ B: per-channel batch-mean then broadcast-back,
    folded into a single (m_pad, m_pad) matrix so each BN stage is one matmul.
    Padded rows/cols stay zero (padded channels get mean=var=0)."""
    p = np.zeros((m_pad, m_pad), np.float32)
    scale = np.float32(1.0 / (n_batch * length))
    for c in range(n_channels):
        sl = slice(c * length, (c + 1) * length)
        p[sl, sl] = scale
    return p


def build_params(key, n_nodes, n_hid, out_channel, ks_x, ks_h, st_x, st_h,
                 total_steps, lane=128):
    ks = jax.random.split(key, 7)

    def xavier(k, fan_out, fan_in):
        std = np.sqrt(2.0 / (fan_in + fan_out))
        return std * jax.random.normal(k, (fan_out, fan_in), jnp.float32)

    o1, o2 = out_channel, 2 * out_channel
    l1 = (total_steps - ks_x) // st_x + 1
    l2 = (l1 - ks_h) // st_h + 1
    m1, m2 = o1 * l1, o2 * l2          # real folded feature widths (60, 56)
    m1p = _round_up(m1, lane)
    m2p = _round_up(m2, lane)

    raw = {
        'wx': 0.1 * jax.random.normal(ks[0], (o1, 1, ks_x), jnp.float32),
        'bx': 0.1 * jax.random.normal(ks[1], (o1,), jnp.float32),
        'wh': 0.1 * jax.random.normal(ks[2], (o2, o1, ks_h), jnp.float32),
        'bh': 0.1 * jax.random.normal(ks[3], (o2,), jnp.float32),
        'wfc': xavier(ks[4], n_hid, m2),
        'bfc': jnp.full((n_hid,), 0.1, jnp.float32),
        'wq': xavier(ks[5], n_hid, n_hid),
        'bq': jnp.full((n_hid,), 0.1, jnp.float32),
        'wk': xavier(ks[6], n_hid, n_hid),
        'bk': jnp.full((n_hid,), 0.1, jnp.float32),
    }

    wgx, bx_f, _ = _fold_conv1d(raw['wx'], raw['bx'], total_steps, st_x,
                                in_rows=total_steps, out_cols=m1p)
    wgh, bh_f, _ = _fold_conv1d(raw['wh'], raw['bh'], l1, st_h,
                                in_rows=m1p, out_cols=m2p)
    p1 = _bn_fold_matrix(o1, l1, n_nodes, m1p)
    p2 = _bn_fold_matrix(o2, l2, n_nodes, m2p)

    wfc_t = np.zeros((m2p, n_hid), np.float32)
    wfc_t[:m2, :] = np.asarray(raw['wfc']).T
    bfc = np.asarray(raw['bfc'], np.float32).reshape(1, n_hid)

    # fused Q|K weight: Q in cols [0, n_hid), K in cols [n_hid, 2*n_hid).
    wqk = np.concatenate([np.asarray(raw['wq']).T, np.asarray(raw['wk']).T],
                         axis=1).astype(np.float32)
    bqk = np.concatenate([np.asarray(raw['bq']), np.asarray(raw['bk'])],
                         axis=0).astype(np.float32).reshape(1, -1)

    folded = {
        # MXU weights stored in bf16 (f32 accumulate in-kernel); biases and the
        # tiny BN-averaging matrices stay f32 for stats precision.
        'wgx': jnp.asarray(wgx, jnp.bfloat16), 'bx': jnp.asarray(bx_f),
        'p1': jnp.asarray(p1),
        'wgh': jnp.asarray(wgh, jnp.bfloat16), 'bh': jnp.asarray(bh_f),
        'p2': jnp.asarray(p2),
        'wfc': jnp.asarray(wfc_t, jnp.bfloat16), 'bfc': jnp.asarray(bfc),
        'wqk': jnp.asarray(wqk, jnp.bfloat16), 'bqk': jnp.asarray(bqk),
    }
    return raw, folded


def _off_diagonal(dense):
    """Row-major off-diagonal entries via the gather-free slice trick."""
    n = dense.shape[0]
    return dense.reshape(-1)[1:].reshape(n - 1, n + 1)[:, :-1].reshape(-1)


def gts_adj_selfattention_forward(inputs, edge_index, folded, n_nodes, n_hid):
    """Full module forward.  `edge_index` is unused by the reference forward."""
    del edge_index
    x2d = inputs.reshape(n_nodes, -1).astype(jnp.float32)
    dense = gts_adj_dense_pallas(x2d, folded, n_hid)
    # dense_to_sparse + remove_self_loops: softmax output is strictly positive,
    # so the sparse pattern is statically all off-diagonal entries (row-major).
    # TODO(synk): exact-zero entries would be dropped by dense_to_sparse; not modeled.
    edge_weights = _off_diagonal(dense)
    return edge_weights, dense


# ---------------------------------------------------------------------------
# Pure-JAX reference (mirrors the PyTorch forward) for a correctness check
# ---------------------------------------------------------------------------
def _batchnorm(x, axes, eps=1e-5):
    m = jnp.mean(x, axis=axes, keepdims=True)
    v = jnp.mean(x * x, axis=axes, keepdims=True) - m * m
    return (x - m) * jax.lax.rsqrt(v + eps)


def reference_dense(inputs, raw, n_nodes, n_hid, st_x, st_h):
    x = inputs.reshape(n_nodes, 1, -1).astype(jnp.float32)
    y = jax.lax.conv_general_dilated(x, raw['wx'], (st_x,), 'VALID',
                                     dimension_numbers=('NCH', 'OIH', 'NCH'))
    y = jax.nn.relu(y + raw['bx'][None, :, None])
    y = _batchnorm(y, (0, 2))
    y = jax.lax.conv_general_dilated(y, raw['wh'], (st_h,), 'VALID',
                                     dimension_numbers=('NCH', 'OIH', 'NCH'))
    y = jax.nn.relu(y + raw['bh'][None, :, None])
    y = _batchnorm(y, (0, 2))
    y = y.reshape(n_nodes, -1)
    y = jax.nn.relu(y @ raw['wfc'].T + raw['bfc'])
    y = _batchnorm(y, (0,))
    q = y @ raw['wq'].T + raw['bq']
    k = y @ raw['wk'].T + raw['bk']
    a = jax.nn.softmax((q @ k.T) / n_hid, axis=1)
    return 0.5 * (a + a.T)


# ---------------------------------------------------------------------------
if __name__ == "__main__":
    # small config consistent with the module
    n_nodes, n_hid, out_channel = 8, 32, 4
    ks_x, st_x, ks_h, st_h, total_steps = 4, 2, 3, 2, 32

    key = jax.random.PRNGKey(0)
    k_param, k_in = jax.random.split(key)
    raw, folded = build_params(k_param, n_nodes, n_hid, out_channel,
                               ks_x, ks_h, st_x, st_h, total_steps)

    inputs = jax.random.normal(k_in, (n_nodes, total_steps), jnp.float32)
    edge_index = jnp.zeros((2, 1), jnp.int32)  # ignored by the forward pass

    edge_w, dense = gts_adj_selfattention_forward(inputs, edge_index, folded,
                                                  n_nodes, n_hid)
    jax.block_until_ready(edge_w)

    ref_dense = np.asarray(reference_dense(inputs, raw, n_nodes, n_hid,
                                           st_x, st_h))
    mask = ~np.eye(n_nodes, dtype=bool)
    ref_edge_w = ref_dense[mask]   # row-major off-diagonal order

    assert edge_w.shape == (n_nodes * (n_nodes - 1),)
    # slightly relaxed atol: kernel runs matmuls with bf16 operands (f32 acc)
    assert np.allclose(np.asarray(edge_w), ref_edge_w, rtol=1e-2, atol=2e-2), (
        np.max(np.abs(np.asarray(edge_w) - ref_edge_w)))
    print("KERNEL_OK")
</pallas_src>

<mosaic_0001>
module attributes {stable_mosaic.version = 11 : i64} {
  func.func @_gts_kernel(%arg0: memref<8x32xf32, #tpu.memory_space<vmem>>, %arg1: memref<32x128xbf16, #tpu.memory_space<vmem>>, %arg2: memref<1x128xf32, #tpu.memory_space<vmem>>, %arg3: memref<128x128xf32, #tpu.memory_space<vmem>>, %arg4: memref<128x128xbf16, #tpu.memory_space<vmem>>, %arg5: memref<1x128xf32, #tpu.memory_space<vmem>>, %arg6: memref<128x128xf32, #tpu.memory_space<vmem>>, %arg7: memref<128x32xbf16, #tpu.memory_space<vmem>>, %arg8: memref<1x32xf32, #tpu.memory_space<vmem>>, %arg9: memref<32x64xbf16, #tpu.memory_space<vmem>>, %arg10: memref<1x64xf32, #tpu.memory_space<vmem>>, %arg11: memref<128x128xf32, #tpu.memory_space<vmem>>) attributes {dimension_semantics = [], scalar_prefetch = 0 : i64, scratch_operands = 0 : i64, tpu.core_type = #tpu.core_type<tc>} {
    %c0 = arith.constant 0 : index
    %c0_0 = arith.constant 0 : index
    %0 = vector.load %arg0[%c0, %c0_0] : memref<8x32xf32, #tpu.memory_space<vmem>>, vector<8x32xf32>
    %1 = arith.truncf %0 : vector<8x32xf32> to vector<8x32xbf16>
    %c0_1 = arith.constant 0 : index
    %c0_2 = arith.constant 0 : index
    %2 = vector.load %arg1[%c0_1, %c0_2] : memref<32x128xbf16, #tpu.memory_space<vmem>>, vector<32x128xbf16>
    %cst = arith.constant dense<0.000000e+00> : vector<8x128xf32>
    %3 = tpu.matmul %1, %2, %cst {dimension_numbers = #tpu.dot_dimension_numbers<[1], [0], [0], [1], [0, 0, 1, 1], [], []>} : vector<8x32xbf16>, vector<32x128xbf16>, vector<8x128xf32> -> vector<8x128xf32>
    %c0_3 = arith.constant 0 : index
    %c0_4 = arith.constant 0 : index
    %4 = vector.load %arg2[%c0_3, %c0_4] : memref<1x128xf32, #tpu.memory_space<vmem>>, vector<1x128xf32>
    %5 = vector.broadcast %4 : vector<1x128xf32> to vector<8x128xf32>
    %6 = arith.addf %3, %5 : vector<8x128xf32>
    %cst_5 = arith.constant 0.000000e+00 : f32
    %7 = vector.broadcast %cst_5 : f32 to vector<8x128xf32>
    %8 = arith.maximumf %6, %7 : vector<8x128xf32>
    %cst_6 = arith.constant dense<0.000000e+00> : vector<128xf32>
    %9 = vector.multi_reduction <add>, %8, %cst_6 [0] : vector<8x128xf32> to vector<128xf32>
    %10 = vector.shape_cast %9 : vector<128xf32> to vector<1x128xf32>
    %11 = arith.mulf %8, %8 : vector<8x128xf32>
    %cst_7 = arith.constant dense<0.000000e+00> : vector<128xf32>
    %12 = vector.multi_reduction <add>, %11, %cst_7 [0] : vector<8x128xf32> to vector<128xf32>
    %13 = vector.shape_cast %12 : vector<128xf32> to vector<1x128xf32>
    %14 = tpu.concatenate %10, %13 in 0 : vector<1x128xf32>, vector<1x128xf32> -> vector<2x128xf32>
    %c0_8 = arith.constant 0 : index
    %c0_9 = arith.constant 0 : index
    %15 = vector.load %arg3[%c0_8, %c0_9] : memref<128x128xf32, #tpu.memory_space<vmem>>, vector<128x128xf32>
    %cst_10 = arith.constant dense<0.000000e+00> : vector<2x128xf32>
    %16 = tpu.matmul %14, %15, %cst_10 {dimension_numbers = #tpu.dot_dimension_numbers<[1], [0], [0], [1], [0, 0, 1, 1], [], []>} : vector<2x128xf32>, vector<128x128xf32>, vector<2x128xf32> -> vector<2x128xf32>
    %17 = vector.extract_strided_slice %16 {offsets = [0, 0], sizes = [1, 128], strides = [1, 1]} : vector<2x128xf32> to vector<1x128xf32>
    %18 = vector.extract_strided_slice %16 {offsets = [1, 0], sizes = [1, 128], strides = [1, 1]} : vector<2x128xf32> to vector<1x128xf32>
    %19 = arith.mulf %17, %17 : vector<1x128xf32>
    %20 = arith.subf %18, %19 : vector<1x128xf32>
    %21 = vector.broadcast %17 : vector<1x128xf32> to vector<8x128xf32>
    %22 = arith.subf %8, %21 : vector<8x128xf32>
    %cst_11 = arith.constant 9.99999974E-6 : f32
    %23 = vector.broadcast %cst_11 : f32 to vector<1x128xf32>
    %24 = arith.addf %20, %23 : vector<1x128xf32>
    %25 = math.rsqrt %24 : vector<1x128xf32>
    %26 = vector.broadcast %25 : vector<1x128xf32> to vector<8x128xf32>
    %27 = arith.mulf %22, %26 : vector<8x128xf32>
    %28 = arith.truncf %27 : vector<8x128xf32> to vector<8x128xbf16>
    %c0_12 = arith.constant 0 : index
    %c0_13 = arith.constant 0 : index
    %29 = vector.load %arg4[%c0_12, %c0_13] : memref<128x128xbf16, #tpu.memory_space<vmem>>, vector<128x128xbf16>
    %cst_14 = arith.constant dense<0.000000e+00> : vector<8x128xf32>
    %30 = tpu.matmul %28, %29, %cst_14 {dimension_numbers = #tpu.dot_dimension_numbers<[1], [0], [0], [1], [0, 0, 1, 1], [], []>} : vector<8x128xbf16>, vector<128x128xbf16>, vector<8x128xf32> -> vector<8x128xf32>
    %c0_15 = arith.constant 0 : index
    %c0_16 = arith.constant 0 : index
    %31 = vector.load %arg5[%c0_15, %c0_16] : memref<1x128xf32, #tpu.memory_space<vmem>>, vector<1x128xf32>
    %32 = vector.broadcast %31 : vector<1x128xf32> to vector<8x128xf32>
    %33 = arith.addf %30, %32 : vector<8x128xf32>
    %cst_17 = arith.constant 0.000000e+00 : f32
    %34 = vector.broadcast %cst_17 : f32 to vector<8x128xf32>
    %35 = arith.maximumf %33, %34 : vector<8x128xf32>
    %cst_18 = arith.constant dense<0.000000e+00> : vector<128xf32>
    %36 = vector.multi_reduction <add>, %35, %cst_18 [0] : vector<8x128xf32> to vector<128xf32>
    %37 = vector.shape_cast %36 : vector<128xf32> to vector<1x128xf32>
    %38 = arith.mulf %35, %35 : vector<8x128xf32>
    %cst_19 = arith.constant dense<0.000000e+00> : vector<128xf32>
    %39 = vector.multi_reduction <add>, %38, %cst_19 [0] : vector<8x128xf32> to vector<128xf32>
    %40 = vector.shape_cast %39 : vector<128xf32> to vector<1x128xf32>
    %41 = tpu.concatenate %37, %40 in 0 : vector<1x128xf32>, vector<1x128xf32> -> vector<2x128xf32>
    %c0_20 = arith.constant 0 : index
    %c0_21 = arith.constant 0 : index
    %42 = vector.load %arg6[%c0_20, %c0_21] : memref<128x128xf32, #tpu.memory_space<vmem>>, vector<128x128xf32>
    %cst_22 = arith.constant dense<0.000000e+00> : vector<2x128xf32>
    %43 = tpu.matmul %41, %42, %cst_22 {dimension_numbers = #tpu.dot_dimension_numbers<[1], [0], [0], [1], [0, 0, 1, 1], [], []>} : vector<2x128xf32>, vector<128x128xf32>, vector<2x128xf32> -> vector<2x128xf32>
    %44 = vector.extract_strided_slice %43 {offsets = [0, 0], sizes = [1, 128], strides = [1, 1]} : vector<2x128xf32> to vector<1x128xf32>
    %45 = vector.extract_strided_slice %43 {offsets = [1, 0], sizes = [1, 128], strides = [1, 1]} : vector<2x128xf32> to vector<1x128xf32>
    %46 = arith.mulf %44, %44 : vector<1x128xf32>
    %47 = arith.subf %45, %46 : vector<1x128xf32>
    %48 = vector.broadcast %44 : vector<1x128xf32> to vector<8x128xf32>
    %49 = arith.subf %35, %48 : vector<8x128xf32>
    %cst_23 = arith.constant 9.99999974E-6 : f32
    %50 = vector.broadcast %cst_23 : f32 to vector<1x128xf32>
    %51 = arith.addf %47, %50 : vector<1x128xf32>
    %52 = math.rsqrt %51 : vector<1x128xf32>
    %53 = vector.broadcast %52 : vector<1x128xf32> to vector<8x128xf32>
    %54 = arith.mulf %49, %53 : vector<8x128xf32>
    %55 = arith.truncf %54 : vector<8x128xf32> to vector<8x128xbf16>
    %c0_24 = arith.constant 0 : index
    %c0_25 = arith.constant 0 : index
    %56 = vector.load %arg7[%c0_24, %c0_25] : memref<128x32xbf16, #tpu.memory_space<vmem>>, vector<128x32xbf16>
    %cst_26 = arith.constant dense<0.000000e+00> : vector<8x32xf32>
    %57 = tpu.matmul %55, %56, %cst_26 {dimension_numbers = #tpu.dot_dimension_numbers<[1], [0], [0], [1], [0, 0, 1, 1], [], []>} : vector<8x128xbf16>, vector<128x32xbf16>, vector<8x32xf32> -> vector<8x32xf32>
    %c0_27 = arith.constant 0 : index
    %c0_28 = arith.constant 0 : index
    %58 = vector.load %arg8[%c0_27, %c0_28] : memref<1x32xf32, #tpu.memory_space<vmem>>, vector<1x32xf32>
    %59 = vector.broadcast %58 : vector<1x32xf32> to vector<8x32xf32>
    %60 = arith.addf %57, %59 : vector<8x32xf32>
    %cst_29 = arith.constant 0.000000e+00 : f32
    %61 = vector.broadcast %cst_29 : f32 to vector<8x32xf32>
    %62 = arith.maximumf %60, %61 : vector<8x32xf32>
    %cst_30 = arith.constant dense<0.000000e+00> : vector<32xf32>
    %63 = vector.multi_reduction <add>, %62, %cst_30 [0] : vector<8x32xf32> to vector<32xf32>
    %64 = vector.shape_cast %63 : vector<32xf32> to vector<1x32xf32>
    %cst_31 = arith.constant 1.250000e-01 : f32
    %65 = vector.broadcast %cst_31 : f32 to vector<1x32xf32>
    %66 = arith.mulf %64, %65 : vector<1x32xf32>
    %67 = arith.mulf %62, %62 : vector<8x32xf32>
    %cst_32 = arith.constant dense<0.000000e+00> : vector<32xf32>
    %68 = vector.multi_reduction <add>, %67, %cst_32 [0] : vector<8x32xf32> to vector<32xf32>
    %69 = vector.shape_cast %68 : vector<32xf32> to vector<1x32xf32>
    %cst_33 = arith.constant 1.250000e-01 : f32
    %70 = vector.broadcast %cst_33 : f32 to vector<1x32xf32>
    %71 = arith.mulf %69, %70 : vector<1x32xf32>
    %72 = arith.mulf %66, %66 : vector<1x32xf32>
    %73 = arith.subf %71, %72 : vector<1x32xf32>
    %74 = vector.broadcast %66 : vector<1x32xf32> to vector<8x32xf32>
    %75 = arith.subf %62, %74 : vector<8x32xf32>
    %cst_34 = arith.constant 9.99999974E-6 : f32
    %76 = vector.broadcast %cst_34 : f32 to vector<1x32xf32>
    %77 = arith.addf %73, %76 : vector<1x32xf32>
    %78 = math.rsqrt %77 : vector<1x32xf32>
    %79 = vector.broadcast %78 : vector<1x32xf32> to vector<8x32xf32>
    %80 = arith.mulf %75, %79 : vector<8x32xf32>
    %81 = arith.truncf %80 : vector<8x32xf32> to vector<8x32xbf16>
    %c0_35 = arith.constant 0 : index
    %c0_36 = arith.constant 0 : index
    %82 = vector.load %arg9[%c0_35, %c0_36] : memref<32x64xbf16, #tpu.memory_space<vmem>>, vector<32x64xbf16>
    %cst_37 = arith.constant dense<0.000000e+00> : vector<8x64xf32>
    %83 = tpu.matmul %81, %82, %cst_37 {dimension_numbers = #tpu.dot_dimension_numbers<[1], [0], [0], [1], [0, 0, 1, 1], [], []>} : vector<8x32xbf16>, vector<32x64xbf16>, vector<8x64xf32> -> vector<8x64xf32>
    %c0_38 = arith.constant 0 : index
    %c0_39 = arith.constant 0 : index
    %84 = vector.load %arg10[%c0_38, %c0_39] : memref<1x64xf32, #tpu.memory_space<vmem>>, vector<1x64xf32>
    %85 = vector.broadcast %84 : vector<1x64xf32> to vector<8x64xf32>
    %86 = arith.addf %83, %85 : vector<8x64xf32>
    %87 = vector.extract_strided_slice %86 {offsets = [0, 0], sizes = [8, 32], strides = [1, 1]} : vector<8x64xf32> to vector<8x32xf32>
    %88 = vector.extract_strided_slice %86 {offsets = [0, 32], sizes = [8, 32], strides = [1, 1]} : vector<8x64xf32> to vector<8x32xf32>
    %cst_40 = arith.constant 0.000000e+00 : f32
    %89 = vector.broadcast %cst_40 : f32 to vector<120x32xf32>
    %90 = tpu.concatenate %88, %89 in 0 : vector<8x32xf32>, vector<120x32xf32> -> vector<128x32xf32>
    %91 = arith.truncf %87 : vector<8x32xf32> to vector<8x32xbf16>
    %92 = arith.truncf %90 : vector<128x32xf32> to vector<128x32xbf16>
    %cst_41 = arith.constant dense<0.000000e+00> : vector<8x128xf32>
    %93 = tpu.matmul %91, %92, %cst_41 {dimension_numbers = #tpu.dot_dimension_numbers<[1], [1], [0], [0], [0, 0, 1, 0], [], []>} : vector<8x32xbf16>, vector<128x32xbf16>, vector<8x128xf32> -> vector<8x128xf32>
    %cst_42 = arith.constant 3.125000e-02 : f32
    %94 = vector.broadcast %cst_42 : f32 to vector<8x128xf32>
    %95 = arith.mulf %93, %94 : vector<8x128xf32>
    %96 = tpu.iota {dimensions = array<i32: 1>} : vector<8x128xi32>
    %c8_i32 = arith.constant 8 : i32
    %97 = vector.broadcast %c8_i32 : i32 to vector<8x128xi32>
    %98 = arith.cmpi slt, %96, %97 : vector<8x128xi32>
    %cst_43 = arith.constant 0xFF800000 : f32
    %99 = vector.broadcast %cst_43 : f32 to vector<8x128xf32>
    %100 = arith.select %98, %95, %99 : vector<8x128xi1>, vector<8x128xf32>
    %cst_44 = arith.constant dense<0xFF800000> : vector<8xf32>
    %101 = vector.multi_reduction <maximumf>, %100, %cst_44 [1] : vector<8x128xf32> to vector<8xf32>
    %102 = vector.shape_cast %101 : vector<8xf32> to vector<8x1xf32>
    %103 = vector.broadcast %102 : vector<8x1xf32> to vector<8x128xf32>
    %104 = arith.subf %95, %103 : vector<8x128xf32>
    %105 = math.exp %104 : vector<8x128xf32>
    %cst_45 = arith.constant 0.000000e+00 : f32
    %106 = vector.broadcast %cst_45 : f32 to vector<8x128xf32>
    %107 = arith.select %98, %105, %106 : vector<8x128xi1>, vector<8x128xf32>
    %cst_46 = arith.constant dense<0.000000e+00> : vector<8xf32>
    %108 = vector.multi_reduction <add>, %107, %cst_46 [1] : vector<8x128xf32> to vector<8xf32>
    %109 = vector.shape_cast %108 : vector<8xf32> to vector<8x1xf32>
    %110 = tpu.reciprocal %109 {approx = true} : vector<8x1xf32> -> vector<8x1xf32>
    %111 = vector.broadcast %110 : vector<8x1xf32> to vector<8x128xf32>
    %112 = arith.mulf %107, %111 : vector<8x128xf32>
    %cst_47 = arith.constant 0.000000e+00 : f32
    %113 = vector.broadcast %cst_47 : f32 to vector<120x128xf32>
    %114 = tpu.concatenate %112, %113 in 0 : vector<8x128xf32>, vector<120x128xf32> -> vector<128x128xf32>
    %115 = tpu.transpose %114, [1, 0] : vector<128x128xf32> -> vector<128x128xf32>
    %116 = arith.addf %114, %115 : vector<128x128xf32>
    %cst_48 = arith.constant 5.000000e-01 : f32
    %117 = vector.broadcast %cst_48 : f32 to vector<128x128xf32>
    %118 = arith.mulf %117, %116 : vector<128x128xf32>
    %c0_49 = arith.constant 0 : index
    %c0_50 = arith.constant 0 : index
    %119 = vector.load %arg11[%c0_49, %c0_50] : memref<128x128xf32, #tpu.memory_space<vmem>>, vector<128x128xf32>
    tpu.vector_store %arg11[%c0_49, %c0_50], %118 {strides = array<i32>} : memref<128x128xf32, #tpu.memory_space<vmem>>, vector<128x128xf32>,
    return
  }
}

</mosaic_0001>

<llo_original>
// kernel: tpu_custom_call.1
$region0: #{tpu_custom_call.1}
  #allocation0 [shape = 'u32[]', space=smem, size = 0x4, offset = 0x4, fixed_abs, tag = 'smem constant byte address 0x4 - core index']
  #allocation1 [shape = 'u32[144,128]{1,0:T(1,128)}', space=vmem, size = 0x12000, scoped, tag = 'internal scratch']
  %s0 = inlined_call_operand.hbm [shape: f32[8,32], index: 0, kind: input, shape index: {}]
  %s1 = inlined_call_operand.vmem [shape: bf16[32,128], index: 1, kind: input, shape index: {}]
  %s2 = inlined_call_operand.vmem [shape: f32[1,128], index: 2, kind: input, shape index: {}]
  %s3 = inlined_call_operand.hbm [shape: f32[128,128], index: 3, kind: input, shape index: {}]
  %s4 = inlined_call_operand.vmem [shape: bf16[128,128], index: 4, kind: input, shape index: {}]
  %s5 = inlined_call_operand.vmem [shape: f32[1,128], index: 5, kind: input, shape index: {}]
  %s6 = inlined_call_operand.hbm [shape: f32[128,128], index: 6, kind: input, shape index: {}]
  %s7 = inlined_call_operand.vmem [shape: bf16[128,32], index: 7, kind: input, shape index: {}]
  %s8 = inlined_call_operand.hbm [shape: f32[1,32], index: 8, kind: input, shape index: {}]
  %s9 = inlined_call_operand.vmem [shape: bf16[32,64], index: 9, kind: input, shape index: {}]
  %s10 = inlined_call_operand.vmem [shape: f32[1,64], index: 10, kind: input, shape index: {}]
  %s11 = inlined_call_operand.hbm [shape: f32[128,128], index: 11, kind: output, shape index: {}]
  %s12 = sld [smem:[#allocation0]]
  $region70: #{tpu_custom_call.1} parent=0
    _
  %s14 = ssub.s32 1, %s12
  %s15 = scalar_select 0, %s14, %s12
  $region1: #{tpu_custom_call.1} parent=0
    #allocation2 [shape = 'u8[4096]{0}', space=vmem, size = 0x1000, scoped, tag = 'input window, operand 0, single buffered']
    #allocation3 [shape = 's32[1]{0}', space=sflag, size = 0x4, scoped, tag = 'scoped memory for tpu_custom_call.1']
    #allocation4 [shape = 's32[1]{0}', space=sflag, size = 0x4, scoped, tag = 'scoped memory for tpu_custom_call.1']
    #allocation5 [shape = 'u8[65536]{0}', space=vmem, size = 0x10000, scoped, tag = 'input window, operand 3, single buffered']
    #allocation6 [shape = 's32[1]{0}', space=sflag, size = 0x4, scoped, tag = 'scoped memory for tpu_custom_call.1']
    #allocation7 [shape = 'u8[65536]{0}', space=vmem, size = 0x10000, scoped, tag = 'input window, operand 6, single buffered']
    #allocation8 [shape = 'u8[512]{0}', space=vmem, size = 0x400, scoped, tag = 'input window, operand 8, single buffered']
    #allocation9 [shape = 's32[1]{0}', space=sflag, size = 0x4, scoped, tag = 'scoped memory for tpu_custom_call.1']
    #allocation10 [shape = 'u8[65536]{0}', space=vmem, size = 0x10000, scoped, tag = 'output window, operand 0, single buffered']
    %16 = vsyncpa [#allocation3], 0
    %17 = vsyncpa [#allocation6], 0
    %18 = vsyncpa [#allocation9], 0
    %19 = vsyncpa [#allocation4], 0
    // Predicated region
    $region2: #{tpu_custom_call.1} parent=1 // pred_check
      _
    $region3: #{tpu_custom_call.1} parent=1 // pred_check_branch
      %21 = sbr.rel (0) target = $region5
    $region4: #{tpu_custom_call.1} parent=1 // pred_region
      %s23 = ssub.s32 128, 128
      %24 = vsyncadd [#allocation3], %s23
      %s26 = sshll.u32 [#allocation2], 4
      %s27 = int_to_ptr.vmem [resolvable:$true] %s26
      %29 = dma.hbm_to_vmem [thread:$0]  %s0, 128, %s27, [#allocation3]
    $region5: #{tpu_custom_call.1} parent=1 // pred_fallthru
      _
    // Predicated region
    $region6: #{tpu_custom_call.1} parent=1 // pred_check
      _
    $region7: #{tpu_custom_call.1} parent=1 // pred_check_branch
      %31 = sbr.rel (0) target = $region9
    $region8: #{tpu_custom_call.1} parent=1 // pred_region
      _
    $region9: #{tpu_custom_call.1} parent=1 // pred_fallthru
      _
    // Predicated region
    $region10: #{tpu_custom_call.1} parent=1 // pred_check
      _
    $region11: #{tpu_custom_call.1} parent=1 // pred_check_branch
      %33 = sbr.rel (0) target = $region13
    $region12: #{tpu_custom_call.1} parent=1 // pred_region
      _
    $region13: #{tpu_custom_call.1} parent=1 // pred_fallthru
      _
    // Predicated region
    $region14: #{tpu_custom_call.1} parent=1 // pred_check
      _
    $region15: #{tpu_custom_call.1} parent=1 // pred_check_branch
      %35 = sbr.rel (0) target = $region17
    $region16: #{tpu_custom_call.1} parent=1 // pred_region
      %s37 = ssub.s32 2048, 2048
      %38 = vsyncadd [#allocation6], %s37
      %s39 = sshll.u32 [#allocation5], 4
      %s40 = int_to_ptr.vmem [resolvable:$true] %s39
      %45 = dma.hbm_to_vmem [thread:$0]  %s3, 2048, %s40, [#allocation6], 128, 128, 8
    $region17: #{tpu_custom_call.1} parent=1 // pred_fallthru
      _
    // Predicated region
    $region18: #{tpu_custom_call.1} parent=1 // pred_check
      _
    $region19: #{tpu_custom_call.1} parent=1 // pred_check_branch
      %47 = sbr.rel (0) target = $region21
    $region20: #{tpu_custom_call.1} parent=1 // pred_region
      _
    $region21: #{tpu_custom_call.1} parent=1 // pred_fallthru
      _
    // Predicated region
    $region22: #{tpu_custom_call.1} parent=1 // pred_check
      _
    $region23: #{tpu_custom_call.1} parent=1 // pred_check_branch
      %49 = sbr.rel (0) target = $region25
    $region24: #{tpu_custom_call.1} parent=1 // pred_region
      _
    $region25: #{tpu_custom_call.1} parent=1 // pred_fallthru
      _
    // Predicated region
    $region26: #{tpu_custom_call.1} parent=1 // pred_check
      _
    $region27: #{tpu_custom_call.1} parent=1 // pred_check_branch
      %51 = sbr.rel (0) target = $region29
    $region28: #{tpu_custom_call.1} parent=1 // pred_region
      %s53 = ssub.s32 2048, 2048
      %54 = vsyncadd [#allocation6], %s53
      %s55 = sshll.u32 [#allocation7], 4
      %s56 = int_to_ptr.vmem [resolvable:$true] %s55
      %61 = dma.hbm_to_vmem [thread:$0]  %s6, 2048, %s56, [#allocation6], 128, 128, 8
    $region29: #{tpu_custom_call.1} parent=1 // pred_fallthru
      _
    // Predicated region
    $region30: #{tpu_custom_call.1} parent=1 // pred_check
      _
    $region31: #{tpu_custom_call.1} parent=1 // pred_check_branch
      %63 = sbr.rel (0) target = $region33
    $region32: #{tpu_custom_call.1} parent=1 // pred_region
      _
    $region33: #{tpu_custom_call.1} parent=1 // pred_fallthru
      _
    // Predicated region
    $region34: #{tpu_custom_call.1} parent=1 // pred_check
      _
    $region35: #{tpu_custom_call.1} parent=1 // pred_check_branch
      %65 = sbr.rel (0) target = $region37
    $region36: #{tpu_custom_call.1} parent=1 // pred_region
      %s67 = ssub.s32 16, 16
      %68 = vsyncadd [#allocation9], %s67
      %s70 = sshll.u32 [#allocation8], 4
      %s71 = int_to_ptr.vmem [resolvable:$true] %s70
      %73 = dma.hbm_to_vmem [thread:$0]  %s8, 16, %s71, [#allocation9]
    $region37: #{tpu_custom_call.1} parent=1 // pred_fallthru
      _
    // Predicated region
    $region38: #{tpu_custom_call.1} parent=1 // pred_check
      _
    $region39: #{tpu_custom_call.1} parent=1 // pred_check_branch
      %75 = sbr.rel (0) target = $region41
    $region40: #{tpu_custom_call.1} parent=1 // pred_region
      _
    $region41: #{tpu_custom_call.1} parent=1 // pred_fallthru
      _
    // Predicated region
    $region42: #{tpu_custom_call.1} parent=1 // pred_check
      _
    $region43: #{tpu_custom_call.1} parent=1 // pred_check_branch
      %77 = sbr.rel (0) target = $region45
    $region44: #{tpu_custom_call.1} parent=1 // pred_region
      _
    $region45: #{tpu_custom_call.1} parent=1 // pred_fallthru
      _
    // Predicated region
    $region46: #{tpu_custom_call.1} parent=1 // pred_check
      _
    $region47: #{tpu_custom_call.1} parent=1 // pred_check_branch
      %79 = sbr.rel (0) target = $region49
    $region48: #{tpu_custom_call.1} parent=1 // pred_region
      %80 = dma.done [#allocation3], 128
    $region49: #{tpu_custom_call.1} parent=1 // pred_fallthru
      _
    // Predicated region
    $region50: #{tpu_custom_call.1} parent=1 // pred_check
      _
    $region51: #{tpu_custom_call.1} parent=1 // pred_check_branch
      %82 = sbr.rel (0) target = $region53
    $region52: #{tpu_custom_call.1} parent=1 // pred_region
      %83 = dma.done [#allocation6], 2048
    $region53: #{tpu_custom_call.1} parent=1 // pred_fallthru
      _
    // Predicated region
    $region54: #{tpu_custom_call.1} parent=1 // pred_check
      _
    $region55: #{tpu_custom_call.1} parent=1 // pred_check_branch
      %85 = sbr.rel (0) target = $region57
    $region56: #{tpu_custom_call.1} parent=1 // pred_region
      %86 = dma.done [#allocation6], 2048
    $region57: #{tpu_custom_call.1} parent=1 // pred_fallthru
      _
    // Predicated region
    $region58: #{tpu_custom_call.1} parent=1 // pred_check
      _
    $region59: #{tpu_custom_call.1} parent=1 // pred_check_branch
      %88 = sbr.rel (0) target = $region61
    $region60: #{tpu_custom_call.1} parent=1 // pred_region
      %89 = dma.done [#allocation9], 16
    $region61: #{tpu_custom_call.1} parent=1 // pred_fallthru
      _
    %v91 = vld [vmem:[#allocation2] sm:$0xff]
    %v92 = vpack.c.bf16 %v91, %v91
    %v93 = vld [vmem:[%s1] sm:$0xf]
    %v94 = vld [vmem:[%s1 + $0x4] sm:$0xf]
    %v95 = vld [vmem:[%s1 + $0x8] sm:$0xf]
    %v96 = vld [vmem:[%s1 + $0xc] sm:$0xf]
    %v97 = vld [vmem:[%s2] sm:$0x1]
    %v99 = vlaneseq
    %v100 = vshrl.u32 %v99, 7
    %v101 = vsub.s32 0, %v100
    %v102 = vrot.slane %v97, %v101
    %v108 = vunpack.c.l.b16 %v93
    %v109 = vunpack.c.l.b16 %v94
    %v110 = vunpack.c.l.b16 %v95
    %v111 = vunpack.c.l.b16 %v96
    %v112 = vpack.c.b16 %v109, %v108
    %v113 = vpack.c.b16 %v111, %v110
    %vm116 = vcmask 261120
    %v118 = vsel %vm116, %v92, 0
    %120 = vmatprep.subr.bf16.mxu0 0
    %121 = vmatpush1.bf16.msra.mxu0 %v112
    %122 = vmatprep.subr.bf16.mxu0 0
    %123 = vmatpush1.bf16.msra.mxu0 %v113
    %124 = vmatprep.subr.bf16.mxu0 0
    %125 = vmatpush1.bf16.msra.mxu0 0
    %126 = vmatprep.subr.bf16.mxu0 0
    %127 = vmatpush1.bf16.msra.mxu0 0
    %128 = vmatprep.subr.bf16.mxu0 0
    %129 = vmatpush1.bf16.msra.mxu0 0
    %130 = vmatprep.subr.bf16.mxu0 0
    %131 = vmatpush1.bf16.msra.mxu0 0
    %132 = vmatprep.subr.bf16.mxu0 0
    %133 = vmatpush1.bf16.msra.mxu0 0
    %134 = vmatprep.subr.bf16.mxu0 0
    %135 = vmatpush1.bf16.msra.mxu0 0
    %136 = vmatprep.subr.bf16.mxu0 0
    %137 = vmatpush1.bf16.msra.mxu0 0
    %138 = vmatprep.subr.bf16.mxu0 0
    %139 = vmatpush1.bf16.msra.mxu0 0
    %140 = vmatprep.subr.bf16.mxu0 0
    %141 = vmatpush1.bf16.msra.mxu0 0
    %142 = vmatprep.subr.bf16.mxu0 0
    %143 = vmatpush1.bf16.msra.mxu0 0
    %144 = vmatprep.subr.bf16.mxu0 0
    %145 = vmatpush1.bf16.msra.mxu0 0
    %146 = vmatprep.subr.bf16.mxu0 0
    %147 = vmatpush1.bf16.msra.mxu0 0
    %148 = vmatprep.subr.bf16.mxu0 0
    %149 = vmatpush1.bf16.msra.mxu0 0
    %150 = vmatprep.subr.bf16.mxu0 0
    %151 = vmatpush1.bf16.msra.mxu0 0
    %152 = vmatprep.mubr.bf16.mxu0 0
    %153 = vmatmul.mubr.bf16.gmra.mrb[0].mxu0 %v118
    %v154 = vpop.f32.mrb[0].mxu0
    %v155 = vadd.f32 %v102, %v154
    %v156 = vpop.f32.mrb[0].mxu0
    %v157 = vpop.f32.mrb[0].mxu0
    %v158 = vpop.f32.mrb[0].mxu0
    %159 = vdwg.mxu0
    %v160 = vmax.f32 %v155, 0.0
    %v161 = vrot.slane %v160, 4
    %v162 = vadd.f32 %v160, %v161
    %v163 = vrot.slane %v162, 2
    %v164 = vadd.f32 %v162, %v163
    %v165 = vrot.slane %v164, 1
    %v166 = vadd.f32 %v164, %v165
    %v167 = vmul.f32 %v160, %v160
    %v168 = vrot.slane %v167, 4
    %v169 = vadd.f32 %v167, %v168
    %v170 = vrot.slane %v169, 2
    %v171 = vadd.f32 %v169, %v170
    %v172 = vrot.slane %v171, 1
    %v173 = vadd.f32 %v171, %v172
    %vm174 = vcmask 1040384
    %v175 = vsel %vm174, %v166, %v173
    %v176 = vld [vmem:[#allocation5] sm:$0xff]
    %v177 = vld [vmem:[#allocation5 + $0x8] sm:$0xff]
    %v178 = vld [vmem:[#allocation5 + $0x10] sm:$0xff]
    %v179 = vld [vmem:[#allocation5 + $0x18] sm:$0xff]
    %v180 = vld [vmem:[#allocation5 + $0x20] sm:$0xff]
    %v181 = vld [vmem:[#allocation5 + $0x28] sm:$0xff]
    %v182 = vld [vmem:[#allocation5 + $0x30] sm:$0xff]
    %v183 = vld [vmem:[#allocation5 + $0x38] sm:$0xff]
    %v184 = vld [vmem:[#allocation5 + $0x40] sm:$0xff]
    %v185 = vld [vmem:[#allocation5 + $0x48] sm:$0xff]
    %v186 = vld [vmem:[#allocation5 + $0x50] sm:$0xff]
    %v187 = vld [vmem:[#allocation5 + $0x58] sm:$0xff]
    %v188 = vld [vmem:[#allocation5 + $0x60] sm:$0xff]
    %v189 = vld [vmem:[#allocation5 + $0x68] sm:$0xff]
    %v190 = vld [vmem:[#allocation5 + $0x70] sm:$0xff]
    %v191 = vld [vmem:[#allocation5 + $0x78] sm:$0xff]
    %192 = vmatprep.subr.mxu0 0.0
    %193 = vmatpush1.msra.mxu0 %v176
    %194 = vmatprep.subr.mxu0 0.0
    %195 = vmatpush1.msra.mxu0 %v177
    %196 = vmatprep.subr.mxu0 0.0
    %197 = vmatpush1.msra.mxu0 %v178
    %198 = vmatprep.subr.mxu0 0.0
    %199 = vmatpush1.msra.mxu0 %v179
    %200 = vmatprep.subr.mxu0 0.0
    %201 = vmatpush1.msra.mxu0 %v180
    %202 = vmatprep.subr.mxu0 0.0
    %203 = vmatpush1.msra.mxu0 %v181
    %204 = vmatprep.subr.mxu0 0.0
    %205 = vmatpush1.msra.mxu0 %v182
    %206 = vmatprep.subr.mxu0 0.0
    %207 = vmatpush1.msra.mxu0 %v183
    %208 = vmatprep.subr.mxu0 0.0
    %209 = vmatpush1.msra.mxu0 %v184
    %210 = vmatprep.subr.mxu0 0.0
    %211 = vmatpush1.msra.mxu0 %v185
    %212 = vmatprep.subr.mxu0 0.0
    %213 = vmatpush1.msra.mxu0 %v186
    %214 = vmatprep.subr.mxu0 0.0
    %215 = vmatpush1.msra.mxu0 %v187
    %216 = vmatprep.subr.mxu0 0.0
    %217 = vmatpush1.msra.mxu0 %v188
    %218 = vmatprep.subr.mxu0 0.0
    %219 = vmatpush1.msra.mxu0 %v189
    %220 = vmatprep.subr.mxu0 0.0
    %221 = vmatpush1.msra.mxu0 %v190
    %222 = vmatprep.subr.mxu0 0.0
    %223 = vmatpush1.msra.mxu0 %v191
    %224 = vmatprep.subr.mxu0 0.0
    %225 = vmatpush1.msra.mxu0 0.0
    %226 = vmatprep.subr.mxu0 0.0
    %227 = vmatpush1.msra.mxu0 0.0
    %228 = vmatprep.subr.mxu0 0.0
    %229 = vmatpush1.msra.mxu0 0.0
    %230 = vmatprep.subr.mxu0 0.0
    %231 = vmatpush1.msra.mxu0 0.0
    %232 = vmatprep.subr.mxu0 0.0
    %233 = vmatpush1.msra.mxu0 0.0
    %234 = vmatprep.subr.mxu0 0.0
    %235 = vmatpush1.msra.mxu0 0.0
    %236 = vmatprep.subr.mxu0 0.0
    %237 = vmatpush1.msra.mxu0 0.0
    %238 = vmatprep.subr.mxu0 0.0
    %239 = vmatpush1.msra.mxu0 0.0
    %240 = vmatprep.subr.mxu0 0.0
    %241 = vmatpush1.msra.mxu0 0.0
    %242 = vmatprep.subr.mxu0 0.0
    %243 = vmatpush1.msra.mxu0 0.0
    %244 = vmatprep.subr.mxu0 0.0
    %245 = vmatpush1.msra.mxu0 0.0
    %246 = vmatprep.subr.mxu0 0.0
    %247 = vmatpush1.msra.mxu0 0.0
    %248 = vmatprep.subr.mxu0 0.0
    %249 = vmatpush1.msra.mxu0 0.0
    %250 = vmatprep.subr.mxu0 0.0
    %251 = vmatpush1.msra.mxu0 0.0
    %252 = vmatprep.subr.mxu0 0.0
    %253 = vmatpush1.msra.mxu0 0.0
    %254 = vmatprep.subr.mxu0 0.0
    %255 = vmatpush1.msra.mxu0 0.0
    %256 = vmatprep.mubr.f32.mxu0 0.0
    %257 = vmatmul.mubr.f32.gmra.mrb[0].mxu0 %v175
    %v258 = vpop.f32.mrb[0].mxu0
    %v259 = vadd.f32 0.0, %v258
    %v260 = vpop.f32.mrb[0].mxu0
    %261 = vdwg.mxu0
    %v262 = vmul.f32 %v259, %v259
    %v264 = vrot.slane %v262, 7
    %v266 = vsub.f32 %v259, %v264
    %v267 = vlaneseq
    %v268 = vshrl.u32 %v267, 7
    %v269 = vsub.s32 0, %v268
    %v270 = vrot.slane %v259, %v269
    %v271 = vsub.f32 %v160, %v270
    %v272 = vadd.f32 %v266, 1e-05
    %v273 = vrsqrt.pop %v272
    %v274 = vlaneseq
    %v275 = vshrl.u32 %v274, 7
    %v276 = vsub.s32 1, %v275
    %v277 = vrot.slane %v273, %v276
    %v278 = vmul.f32 %v271, %v277
    %v279 = vpack.c.bf16 %v278, %v278
    %v280 = vld [vmem:[%s4] sm:$0xf]
    %v281 = vld [vmem:[%s4 + $0x4] sm:$0xf]
    %v282 = vld [vmem:[%s4 + $0x8] sm:$0xf]
    %v283 = vld [vmem:[%s4 + $0xc] sm:$0xf]
    %v284 = vld [vmem:[%s4 + $0x10] sm:$0xf]
    %v285 = vld [vmem:[%s4 + $0x14] sm:$0xf]
    %v286 = vld [vmem:[%s4 + $0x18] sm:$0xf]
    %v287 = vld [vmem:[%s4 + $0x1c] sm:$0xf]
    %v288 = vld [vmem:[%s4 + $0x20] sm:$0xf]
    %v289 = vld [vmem:[%s4 + $0x24] sm:$0xf]
    %v290 = vld [vmem:[%s4 + $0x28] sm:$0xf]
    %v291 = vld [vmem:[%s4 + $0x2c] sm:$0xf]
    %v292 = vld [vmem:[%s4 + $0x30] sm:$0xf]
    %v293 = vld [vmem:[%s4 + $0x34] sm:$0xf]
    %v294 = vld [vmem:[%s4 + $0x38] sm:$0xf]
    %v295 = vld [vmem:[%s4 + $0x3c] sm:$0xf]
    %v296 = vld [vmem:[%s5] sm:$0x1]
    %v298 = vlaneseq
    %v299 = vshrl.u32 %v298, 7
    %v300 = vsub.s32 0, %v299
    %v301 = vrot.slane %v296, %v300
    %v319 = vunpack.c.l.b16 %v280
    %v320 = vunpack.c.l.b16 %v281
    %v321 = vunpack.c.l.b16 %v282
    %v322 = vunpack.c.l.b16 %v283
    %v323 = vunpack.c.l.b16 %v284
    %v324 = vunpack.c.l.b16 %v285
    %v325 = vunpack.c.l.b16 %v286
    %v326 = vunpack.c.l.b16 %v287
    %v327 = vunpack.c.l.b16 %v288
    %v328 = vunpack.c.l.b16 %v289
    %v329 = vunpack.c.l.b16 %v290
    %v330 = vunpack.c.l.b16 %v291
    %v331 = vunpack.c.l.b16 %v292
    %v332 = vunpack.c.l.b16 %v293
    %v333 = vunpack.c.l.b16 %v294
    %v334 = vunpack.c.l.b16 %v295
    %v335 = vpack.c.b16 %v320, %v319
    %v336 = vpack.c.b16 %v322, %v321
    %v337 = vpack.c.b16 %v324, %v323
    %v338 = vpack.c.b16 %v326, %v325
    %v339 = vpack.c.b16 %v328, %v327
    %v340 = vpack.c.b16 %v330, %v329
    %v341 = vpack.c.b16 %v332, %v331
    %v342 = vpack.c.b16 %v334, %v333
    %351 = vmatprep.subr.bf16.mxu0 0
    %352 = vmatpush1.bf16.msra.mxu0 %v335
    %353 = vmatprep.subr.bf16.mxu0 0
    %354 = vmatpush1.bf16.msra.mxu0 %v336
    %355 = vmatprep.subr.bf16.mxu0 0
    %356 = vmatpush1.bf16.msra.mxu0 %v337
    %357 = vmatprep.subr.bf16.mxu0 0
    %358 = vmatpush1.bf16.msra.mxu0 %v338
    %359 = vmatprep.subr.bf16.mxu0 0
    %360 = vmatpush1.bf16.msra.mxu0 %v339
    %361 = vmatprep.subr.bf16.mxu0 0
    %362 = vmatpush1.bf16.msra.mxu0 %v340
    %363 = vmatprep.subr.bf16.mxu0 0
    %364 = vmatpush1.bf16.msra.mxu0 %v341
    %365 = vmatprep.subr.bf16.mxu0 0
    %366 = vmatpush1.bf16.msra.mxu0 %v342
    %367 = vmatprep.subr.bf16.mxu0 0
    %368 = vmatpush1.bf16.msra.mxu0 0
    %369 = vmatprep.subr.bf16.mxu0 0
    %370 = vmatpush1.bf16.msra.mxu0 0
    %371 = vmatprep.subr.bf16.mxu0 0
    %372 = vmatpush1.bf16.msra.mxu0 0
    %373 = vmatprep.subr.bf16.mxu0 0
    %374 = vmatpush1.bf16.msra.mxu0 0
    %375 = vmatprep.subr.bf16.mxu0 0
    %376 = vmatpush1.bf16.msra.mxu0 0
    %377 = vmatprep.subr.bf16.mxu0 0
    %378 = vmatpush1.bf16.msra.mxu0 0
    %379 = vmatprep.subr.bf16.mxu0 0
    %380 = vmatpush1.bf16.msra.mxu0 0
    %381 = vmatprep.subr.bf16.mxu0 0
    %382 = vmatpush1.bf16.msra.mxu0 0
    %383 = vmatprep.mubr.bf16.mxu0 0
    %384 = vmatmul.mubr.bf16.gmra.mrb[0].mxu0 %v279
    %v385 = vpop.f32.mrb[0].mxu0
    %v386 = vadd.f32 %v301, %v385
    %v387 = vpop.f32.mrb[0].mxu0
    %v388 = vpop.f32.mrb[0].mxu0
    %v389 = vpop.f32.mrb[0].mxu0
    %390 = vdwg.mxu0
    %v391 = vmax.f32 %v386, 0.0
    %v392 = vrot.slane %v391, 4
    %v393 = vadd.f32 %v391, %v392
    %v394 = vrot.slane %v393, 2
    %v395 = vadd.f32 %v393, %v394
    %v396 = vrot.slane %v395, 1
    %v397 = vadd.f32 %v395, %v396
    %v398 = vmul.f32 %v391, %v391
    %v399 = vrot.slane %v398, 4
    %v400 = vadd.f32 %v398, %v399
    %v401 = vrot.slane %v400, 2
    %v402 = vadd.f32 %v400, %v401
    %v403 = vrot.slane %v402, 1
    %v404 = vadd.f32 %v402, %v403
    %v405 = vsel %vm174, %v397, %v404
    %v406 = vld [vmem:[#allocation7] sm:$0xff]
    %v407 = vld [vmem:[#allocation7 + $0x8] sm:$0xff]
    %v408 = vld [vmem:[#allocation7 + $0x10] sm:$0xff]
    %v409 = vld [vmem:[#allocation7 + $0x18] sm:$0xff]
    %v410 = vld [vmem:[#allocation7 + $0x20] sm:$0xff]
    %v411 = vld [vmem:[#allocation7 + $0x28] sm:$0xff]
    %v412 = vld [vmem:[#allocation7 + $0x30] sm:$0xff]
    %v413 = vld [vmem:[#allocation7 + $0x38] sm:$0xff]
    %v414 = vld [vmem:[#allocation7 + $0x40] sm:$0xff]
    %v415 = vld [vmem:[#allocation7 + $0x48] sm:$0xff]
    %v416 = vld [vmem:[#allocation7 + $0x50] sm:$0xff]
    %v417 = vld [vmem:[#allocation7 + $0x58] sm:$0xff]
    %v418 = vld [vmem:[#allocation7 + $0x60] sm:$0xff]
    %v419 = vld [vmem:[#allocation7 + $0x68] sm:$0xff]
    %v420 = vld [vmem:[#allocation7 + $0x70] sm:$0xff]
    %v421 = vld [vmem:[#allocation7 + $0x78] sm:$0xff]
    %422 = vmatprep.subr.mxu0 0.0
    %423 = vmatpush1.msra.mxu0 %v406
    %424 = vmatprep.subr.mxu0 0.0
    %425 = vmatpush1.msra.mxu0 %v407
    %426 = vmatprep.subr.mxu0 0.0
    %427 = vmatpush1.msra.mxu0 %v408
    %428 = vmatprep.subr.mxu0 0.0
    %429 = vmatpush1.msra.mxu0 %v409
    %430 = vmatprep.subr.mxu0 0.0
    %431 = vmatpush1.msra.mxu0 %v410
    %432 = vmatprep.subr.mxu0 0.0
    %433 = vmatpush1.msra.mxu0 %v411
    %434 = vmatprep.subr.mxu0 0.0
    %435 = vmatpush1.msra.mxu0 %v412
    %436 = vmatprep.subr.mxu0 0.0
    %437 = vmatpush1.msra.mxu0 %v413
    %438 = vmatprep.subr.mxu0 0.0
    %439 = vmatpush1.msra.mxu0 %v414
    %440 = vmatprep.subr.mxu0 0.0
    %441 = vmatpush1.msra.mxu0 %v415
    %442 = vmatprep.subr.mxu0 0.0
    %443 = vmatpush1.msra.mxu0 %v416
    %444 = vmatprep.subr.mxu0 0.0
    %445 = vmatpush1.msra.mxu0 %v417
    %446 = vmatprep.subr.mxu0 0.0
    %447 = vmatpush1.msra.mxu0 %v418
    %448 = vmatprep.subr.mxu0 0.0
    %449 = vmatpush1.msra.mxu0 %v419
    %450 = vmatprep.subr.mxu0 0.0
    %451 = vmatpush1.msra.mxu0 %v420
    %452 = vmatprep.subr.mxu0 0.0
    %453 = vmatpush1.msra.mxu0 %v421
    %454 = vmatprep.subr.mxu0 0.0
    %455 = vmatpush1.msra.mxu0 0.0
    %456 = vmatprep.subr.mxu0 0.0
    %457 = vmatpush1.msra.mxu0 0.0
    %458 = vmatprep.subr.mxu0 0.0
    %459 = vmatpush1.msra.mxu0 0.0
    %460 = vmatprep.subr.mxu0 0.0
    %461 = vmatpush1.msra.mxu0 0.0
    %462 = vmatprep.subr.mxu0 0.0
    %463 = vmatpush1.msra.mxu0 0.0
    %464 = vmatprep.subr.mxu0 0.0
    %465 = vmatpush1.msra.mxu0 0.0
    %466 = vmatprep.subr.mxu0 0.0
    %467 = vmatpush1.msra.mxu0 0.0
    %468 = vmatprep.subr.mxu0 0.0
    %469 = vmatpush1.msra.mxu0 0.0
    %470 = vmatprep.subr.mxu0 0.0
    %471 = vmatpush1.msra.mxu0 0.0
    %472 = vmatprep.subr.mxu0 0.0
    %473 = vmatpush1.msra.mxu0 0.0
    %474 = vmatprep.subr.mxu0 0.0
    %475 = vmatpush1.msra.mxu0 0.0
    %476 = vmatprep.subr.mxu0 0.0
    %477 = vmatpush1.msra.mxu0 0.0
    %478 = vmatprep.subr.mxu0 0.0
    %479 = vmatpush1.msra.mxu0 0.0
    %480 = vmatprep.subr.mxu0 0.0
    %481 = vmatpush1.msra.mxu0 0.0
    %482 = vmatprep.subr.mxu0 0.0
    %483 = vmatpush1.msra.mxu0 0.0
    %484 = vmatprep.subr.mxu0 0.0
    %485 = vmatpush1.msra.mxu0 0.0
    %486 = vmatprep.mubr.f32.mxu0 0.0
    %487 = vmatmul.mubr.f32.gmra.mrb[0].mxu0 %v405
    %v488 = vpop.f32.mrb[0].mxu0
    %v489 = vadd.f32 0.0, %v488
    %v490 = vpop.f32.mrb[0].mxu0
    %491 = vdwg.mxu0
    %v492 = vmul.f32 %v489, %v489
    %v494 = vrot.slane %v492, 7
    %v496 = vsub.f32 %v489, %v494
    %v497 = vlaneseq
    %v498 = vshrl.u32 %v497, 7
    %v499 = vsub.s32 0, %v498
    %v500 = vrot.slane %v489, %v499
    %v501 = vsub.f32 %v391, %v500
    %v502 = vadd.f32 %v496, 1e-05
    %v503 = vrsqrt.pop %v502
    %v504 = vlaneseq
    %v505 = vshrl.u32 %v504, 7
    %v506 = vsub.s32 1, %v505
    %v507 = vrot.slane %v503, %v506
    %v508 = vmul.f32 %v501, %v507
    %v509 = vpack.c.bf16 %v508, %v508
    %v510 = vld [vmem:[%s7] sm:$0xf]
    %v511 = vld [vmem:[%s7 + $0x4] sm:$0xf]
    %v512 = vld [vmem:[%s7 + $0x8] sm:$0xf]
    %v513 = vld [vmem:[%s7 + $0xc] sm:$0xf]
    %v514 = vld [vmem:[%s7 + $0x10] sm:$0xf]
    %v515 = vld [vmem:[%s7 + $0x14] sm:$0xf]
    %v516 = vld [vmem:[%s7 + $0x18] sm:$0xf]
    %v517 = vld [vmem:[%s7 + $0x1c] sm:$0xf]
    %v518 = vld [vmem:[%s7 + $0x20] sm:$0xf]
    %v519 = vld [vmem:[%s7 + $0x24] sm:$0xf]
    %v520 = vld [vmem:[%s7 + $0x28] sm:$0xf]
    %v521 = vld [vmem:[%s7 + $0x2c] sm:$0xf]
    %v522 = vld [vmem:[%s7 + $0x30] sm:$0xf]
    %v523 = vld [vmem:[%s7 + $0x34] sm:$0xf]
    %v524 = vld [vmem:[%s7 + $0x38] sm:$0xf]
    %v525 = vld [vmem:[%s7 + $0x3c] sm:$0xf]
    %v526 = vld [vmem:[#allocation8] sm:$0x1]
    %v528 = vlaneseq
    %v529 = vshrl.u32 %v528, 7
    %v530 = vsub.s32 0, %v529
    %v531 = vrot.slane %v526, %v530
    %v549 = vunpack.c.l.b16 %v510
    %v550 = vunpack.c.l.b16 %v511
    %v551 = vunpack.c.l.b16 %v512
    %v552 = vunpack.c.l.b16 %v513
    %v553 = vunpack.c.l.b16 %v514
    %v554 = vunpack.c.l.b16 %v515
    %v555 = vunpack.c.l.b16 %v516
    %v556 = vunpack.c.l.b16 %v517
    %v557 = vunpack.c.l.b16 %v518
    %v558 = vunpack.c.l.b16 %v519
    %v559 = vunpack.c.l.b16 %v520
    %v560 = vunpack.c.l.b16 %v521
    %v561 = vunpack.c.l.b16 %v522
    %v562 = vunpack.c.l.b16 %v523
    %v563 = vunpack.c.l.b16 %v524
    %v564 = vunpack.c.l.b16 %v525
    %v565 = vpack.c.b16 %v550, %v549
    %v566 = vpack.c.b16 %v552, %v551
    %v567 = vpack.c.b16 %v554, %v553
    %v568 = vpack.c.b16 %v556, %v555
    %v569 = vpack.c.b16 %v558, %v557
    %v570 = vpack.c.b16 %v560, %v559
    %v571 = vpack.c.b16 %v562, %v561
    %v572 = vpack.c.b16 %v564, %v563
    %581 = vmatprep.subr.bf16.mxu0 0
    %582 = vmatpush1.bf16.msra.mxu0 %v565
    %583 = vmatprep.subr.bf16.mxu0 0
    %584 = vmatpush1.bf16.msra.mxu0 %v566
    %585 = vmatprep.subr.bf16.mxu0 0
    %586 = vmatpush1.bf16.msra.mxu0 %v567
    %587 = vmatprep.subr.bf16.mxu0 0
    %588 = vmatpush1.bf16.msra.mxu0 %v568
    %589 = vmatprep.subr.bf16.mxu0 0
    %590 = vmatpush1.bf16.msra.mxu0 %v569
    %591 = vmatprep.subr.bf16.mxu0 0
    %592 = vmatpush1.bf16.msra.mxu0 %v570
    %593 = vmatprep.subr.bf16.mxu0 0
    %594 = vmatpush1.bf16.msra.mxu0 %v571
    %595 = vmatprep.subr.bf16.mxu0 0
    %596 = vmatpush1.bf16.msra.mxu0 %v572
    %597 = vmatprep.subr.bf16.mxu0 0
    %598 = vmatpush1.bf16.msra.mxu0 0
    %599 = vmatprep.subr.bf16.mxu0 0
    %600 = vmatpush1.bf16.msra.mxu0 0
    %601 = vmatprep.subr.bf16.mxu0 0
    %602 = vmatpush1.bf16.msra.mxu0 0
    %603 = vmatprep.subr.bf16.mxu0 0
    %604 = vmatpush1.bf16.msra.mxu0 0
    %605 = vmatprep.subr.bf16.mxu0 0
    %606 = vmatpush1.bf16.msra.mxu0 0
    %607 = vmatprep.subr.bf16.mxu0 0
    %608 = vmatpush1.bf16.msra.mxu0 0
    %609 = vmatprep.subr.bf16.mxu0 0
    %610 = vmatpush1.bf16.msra.mxu0 0
    %611 = vmatprep.subr.bf16.mxu0 0
    %612 = vmatpush1.bf16.msra.mxu0 0
    %613 = vmatprep.mubr.bf16.mxu0 0
    %614 = vmatmul.mubr.bf16.gmra.mrb[0].mxu0 %v509
    %v615 = vpop.f32.mrb[0].mxu0
    %v616 = vadd.f32 %v531, %v615
    %v617 = vpop.f32.mrb[0].mxu0
    %v618 = vpop.f32.mrb[0].mxu0
    %v619 = vpop.f32.mrb[0].mxu0
    %620 = vdwg.mxu0
    %v621 = vmax.f32 %v616, 0.0
    %v622 = vsel %vm116, %v621, 0.0
    %v623 = vrot.slane %v622, 4
    %v624 = vadd.f32 %v622, %v623
    %v625 = vrot.slane %v624, 2
    %v626 = vadd.f32 %v624, %v625
    %v627 = vrot.slane %v626, 1
    %v628 = vadd.f32 %v626, %v627
    %v629 = vmul.f32 %v628, 0.125
    %v630 = vmul.f32 %v621, %v621
    %v631 = vsel %vm116, %v630, 0.0
    %v632 = vrot.slane %v631, 4
    %v633 = vadd.f32 %v631, %v632
    %v634 = vrot.slane %v633, 2
    %v635 = vadd.f32 %v633, %v634
    %v636 = vrot.slane %v635, 1
    %v637 = vadd.f32 %v635, %v636
    %v638 = vmul.f32 %v637, 0.125
    %v639 = vmul.f32 %v629, %v629
    %v640 = vsub.f32 %v638, %v639
    %v641 = vsub.f32 %v621, %v629
    %v642 = vadd.f32 %v640, 1e-05
    %v643 = vrsqrt.pop %v642
    %v644 = vmul.f32 %v641, %v643
    %v645 = vpack.c.bf16 %v644, %v644
    %v646 = vld [vmem:[%s9] sm:$0xf]
    %v647 = vld [vmem:[%s9 + $0x4] sm:$0xf]
    %v648 = vld [vmem:[%s9 + $0x8] sm:$0xf]
    %v649 = vld [vmem:[%s9 + $0xc] sm:$0xf]
    %v650 = vld [vmem:[%s10] sm:$0x1]
    %v652 = vlaneseq
    %v653 = vshrl.u32 %v652, 7
    %v654 = vsub.s32 0, %v653
    %v655 = vrot.slane %v650, %v654
    %v661 = vunpack.c.l.b16 %v646
    %v662 = vunpack.c.l.b16 %v647
    %v663 = vunpack.c.l.b16 %v648
    %v664 = vunpack.c.l.b16 %v649
    %v665 = vpack.c.b16 %v662, %v661
    %v666 = vpack.c.b16 %v664, %v663
    %v670 = vsel %vm116, %v645, 0
    %672 = vmatprep.subr.bf16.mxu0 0
    %673 = vmatpush1.bf16.msra.mxu0 %v665
    %674 = vmatprep.subr.bf16.mxu0 0
    %675 = vmatpush1.bf16.msra.mxu0 %v666
    %676 = vmatprep.subr.bf16.mxu0 0
    %677 = vmatpush1.bf16.msra.mxu0 0
    %678 = vmatprep.subr.bf16.mxu0 0
    %679 = vmatpush1.bf16.msra.mxu0 0
    %680 = vmatprep.subr.bf16.mxu0 0
    %681 = vmatpush1.bf16.msra.mxu0 0
    %682 = vmatprep.subr.bf16.mxu0 0
    %683 = vmatpush1.bf16.msra.mxu0 0
    %684 = vmatprep.subr.bf16.mxu0 0
    %685 = vmatpush1.bf16.msra.mxu0 0
    %686 = vmatprep.subr.bf16.mxu0 0
    %687 = vmatpush1.bf16.msra.mxu0 0
    %688 = vmatprep.subr.bf16.mxu0 0
    %689 = vmatpush1.bf16.msra.mxu0 0
    %690 = vmatprep.subr.bf16.mxu0 0
    %691 = vmatpush1.bf16.msra.mxu0 0
    %692 = vmatprep.subr.bf16.mxu0 0
    %693 = vmatpush1.bf16.msra.mxu0 0
    %694 = vmatprep.subr.bf16.mxu0 0
    %695 = vmatpush1.bf16.msra.mxu0 0
    %696 = vmatprep.subr.bf16.mxu0 0
    %697 = vmatpush1.bf16.msra.mxu0 0
    %698 = vmatprep.subr.bf16.mxu0 0
    %699 = vmatpush1.bf16.msra.mxu0 0
    %700 = vmatprep.subr.bf16.mxu0 0
    %701 = vmatpush1.bf16.msra.mxu0 0
    %702 = vmatprep.subr.bf16.mxu0 0
    %703 = vmatpush1.bf16.msra.mxu0 0
    %704 = vmatprep.mubr.bf16.mxu0 0
    %705 = vmatmul.mubr.bf16.gmra.mrb[0].mxu0 %v670
    %v706 = vpop.f32.mrb[0].mxu0
    %v707 = vadd.f32 %v655, %v706
    %v708 = vpop.f32.mrb[0].mxu0
    %v709 = vpop.f32.mrb[0].mxu0
    %v710 = vpop.f32.mrb[0].mxu0
    %711 = vdwg.mxu0
    %v712 = vpack.c.bf16 %v707, %v707
    %v713 = vpack.c.bf16 0.0, %v707
    %v714 = vpack.c.bf16 0.0, 0.0
    %717 = vrot.lane.b32.xlu0 %v713, 96
    %v718 = vpop.permute.xlu0 %717
    %719 = vrot.lane.b32.xlu0 %v714, 96
    %v720 = vpop.permute.xlu0 %719
    %v722 = vsel %vm116, %v712, 0
    %v725 = vsel %vm116, %v718, 0
    %v728 = vsel %vm116, %v720, 0
    %730 = vmatprep.subr.bf16.mxu0 0
    %731 = vmatpush1.bf16.xpose.msra.mxu0 %v725
    %732 = vmatprep.subr.bf16.mxu0 0
    %733 = vmatpush1.bf16.xpose.msra.mxu0 %v728
    %734 = vmatprep.subr.bf16.mxu0 0
    %735 = vmatpush1.bf16.xpose.msra.mxu0 %v728
    %736 = vmatprep.subr.bf16.mxu0 0
    %737 = vmatpush1.bf16.xpose.msra.mxu0 %v728
    %738 = vmatprep.subr.bf16.mxu0 0
    %739 = vmatpush1.bf16.xpose.msra.mxu0 %v728
    %740 = vmatprep.subr.bf16.mxu0 0
    %741 = vmatpush1.bf16.xpose.msra.mxu0 %v728
    %742 = vmatprep.subr.bf16.mxu0 0
    %743 = vmatpush1.bf16.xpose.msra.mxu0 %v728
    %744 = vmatprep.subr.bf16.mxu0 0
    %745 = vmatpush1.bf16.xpose.msra.mxu0 %v728
    %746 = vmatprep.subr.bf16.mxu0 0
    %747 = vmatpush1.bf16.xpose.msra.mxu0 0
    %748 = vmatprep.subr.bf16.mxu0 0
    %749 = vmatpush1.bf16.xpose.msra.mxu0 0
    %750 = vmatprep.subr.bf16.mxu0 0
    %751 = vmatpush1.bf16.xpose.msra.mxu0 0
    %752 = vmatprep.subr.bf16.mxu0 0
    %753 = vmatpush1.bf16.xpose.msra.mxu0 0
    %754 = vmatprep.subr.bf16.mxu0 0
    %755 = vmatpush1.bf16.xpose.msra.mxu0 0
    %756 = vmatprep.subr.bf16.mxu0 0
    %757 = vmatpush1.bf16.xpose.msra.mxu0 0
    %758 = vmatprep.subr.bf16.mxu0 0
    %759 = vmatpush1.bf16.xpose.msra.mxu0 0
    %760 = vmatprep.subr.bf16.mxu0 0
    %761 = vmatpush1.bf16.xpose.msra.mxu0 0
    %762 = vmatprep.mubr.bf16.mxu0 0
    %763 = vmatmul.mubr.bf16.gmra.mrb[0].mxu0 %v722
    %v764 = vpop.f32.mrb[0].mxu0
    %v765 = vadd.f32 0.0, %v764
    %v766 = vpop.f32.mrb[0].mxu0
    %v767 = vpop.f32.mrb[0].mxu0
    %v768 = vpop.f32.mrb[0].mxu0
    %769 = vdwg.mxu0
    %v770 = vmul.f32 %v765, 0.03125
    %v771 = vlaneseq
    %v772 = vand.u32 %v771, 127
    %vm773 = vcmp.lt.s32.totalorder %v772, 8
    %v774 = vsel %vm773, %v770, -inf
    %775 = vmax.xlane.f32.xlu0 %v774
    %v776 = vpop.xlane.xlu0 %775
    %v777 = vsub.f32 %v770, %v776
    %v778 = vmul.f32 %v777, 1.442695
    %v779 = vpow.pop %v778
    %v780 = vsel %vm773, %v779, 0.0
    %781 = vadd.xlane.f32.xlu0 %v780
    %v782 = vpop.xlane.xlu0 %781
    %v783 = vrcp.pop %v782
    %v784 = vmul.f32 %v780, %v783
    %785 = vxpose.xlu0.b32.start [1/16] %v784, 128
    %786 = vxpose.xlu0.b32.cont [2/16] 0.0, 128
    %787 = vxpose.xlu0.b32.cont [3/16] 0.0, 128
    %788 = vxpose.xlu0.b32.cont [4/16] 0.0, 128
    %789 = vxpose.xlu0.b32.cont [5/16] 0.0, 128
    %790 = vxpose.xlu0.b32.cont [6/16] 0.0, 128
    %791 = vxpose.xlu0.b32.cont [7/16] 0.0, 128
    %792 = vxpose.xlu0.b32.cont [8/16] 0.0, 128
    %793 = vxpose.xlu0.b32.cont [9/16] 0.0, 128
    %794 = vxpose.xlu0.b32.cont [10/16] 0.0, 128
    %795 = vxpose.xlu0.b32.cont [11/16] 0.0, 128
    %796 = vxpose.xlu0.b32.cont [12/16] 0.0, 128
    %797 = vxpose.xlu0.b32.cont [13/16] 0.0, 128
    %798 = vxpose.xlu0.b32.cont [14/16] 0.0, 128
    %799 = vxpose.xlu0.b32.cont [15/16] 0.0, 128
    %800 = vxpose.xlu0.b32.end [16/16] 0.0, 128
    %v801 = vpop.trf.xlu0
    %v802 = vpop.trf.xlu0
    %v803 = vpop.trf.xlu0
    %v804 = vpop.trf.xlu0
    %v805 = vpop.trf.xlu0
    %v806 = vpop.trf.xlu0
    %v807 = vpop.trf.xlu0
    %v808 = vpop.trf.xlu0
    %v809 = vpop.trf.xlu0
    %v810 = vpop.trf.xlu0
    %v811 = vpop.trf.xlu0
    %v812 = vpop.trf.xlu0
    %v813 = vpop.trf.xlu0
    %v814 = vpop.trf.xlu0
    %v815 = vpop.trf.xlu0
    %v816 = vpop.trf.xlu0
    %v817 = vadd.f32 %v784, %v801
    %v818 = vadd.f32 %v802, 0.0
    %v819 = vadd.f32 %v803, 0.0
    %v820 = vadd.f32 %v804, 0.0
    %v821 = vadd.f32 %v805, 0.0
    %v822 = vadd.f32 %v806, 0.0
    %v823 = vadd.f32 %v807, 0.0
    %v824 = vadd.f32 %v808, 0.0
    %v825 = vadd.f32 %v809, 0.0
    %v826 = vadd.f32 %v810, 0.0
    %v827 = vadd.f32 %v811, 0.0
    %v828 = vadd.f32 %v812, 0.0
    %v829 = vadd.f32 %v813, 0.0
    %v830 = vadd.f32 %v814, 0.0
    %v831 = vadd.f32 %v815, 0.0
    %v832 = vadd.f32 %v816, 0.0
    %v833 = vmul.f32 %v817, 0.5
    %v834 = vmul.f32 %v818, 0.5
    %v835 = vmul.f32 %v819, 0.5
    %v836 = vmul.f32 %v820, 0.5
    %v837 = vmul.f32 %v821, 0.5
    %v838 = vmul.f32 %v822, 0.5
    %v839 = vmul.f32 %v823, 0.5
    %v840 = vmul.f32 %v824, 0.5
    %v841 = vmul.f32 %v825, 0.5
    %v842 = vmul.f32 %v826, 0.5
    %v843 = vmul.f32 %v827, 0.5
    %v844 = vmul.f32 %v828, 0.5
    %v845 = vmul.f32 %v829, 0.5
    %v846 = vmul.f32 %v830, 0.5
    %v847 = vmul.f32 %v831, 0.5
    %v848 = vmul.f32 %v832, 0.5
    %849 = vst [vmem:[#allocation10] sm:$0xff] %v833
    %850 = vst [vmem:[#allocation10 + $0x8] sm:$0xff] %v834
    %851 = vst [vmem:[#allocation10 + $0x10] sm:$0xff] %v835
    %852 = vst [vmem:[#allocation10 + $0x18] sm:$0xff] %v836
    %853 = vst [vmem:[#allocation10 + $0x20] sm:$0xff] %v837
    %854 = vst [vmem:[#allocation10 + $0x28] sm:$0xff] %v838
    %855 = vst [vmem:[#allocation10 + $0x30] sm:$0xff] %v839
    %856 = vst [vmem:[#allocation10 + $0x38] sm:$0xff] %v840
    %857 = vst [vmem:[#allocation10 + $0x40] sm:$0xff] %v841
    %858 = vst [vmem:[#allocation10 + $0x48] sm:$0xff] %v842
    %859 = vst [vmem:[#allocation10 + $0x50] sm:$0xff] %v843
    %860 = vst [vmem:[#allocation10 + $0x58] sm:$0xff] %v844
    %861 = vst [vmem:[#allocation10 + $0x60] sm:$0xff] %v845
    %862 = vst [vmem:[#allocation10 + $0x68] sm:$0xff] %v846
    %863 = vst [vmem:[#allocation10 + $0x70] sm:$0xff] %v847
    %864 = vst [vmem:[#allocation10 + $0x78] sm:$0xff] %v848
    // Predicated region
    $region62: #{tpu_custom_call.1} parent=1 // pred_check
      _
    $region63: #{tpu_custom_call.1} parent=1 // pred_check_branch
      %866 = sbr.rel (0) target = $region65
    $region64: #{tpu_custom_call.1} parent=1 // pred_region
      %s868 = ssub.s32 2048, 2048
      %869 = vsyncadd [#allocation4], %s868
      %s870 = sshll.u32 [#allocation10], 4
      %s871 = int_to_ptr.vmem [resolvable:$true] %s870
      %876 = dma.vmem_to_hbm [thread:$0]  %s871, 2048, %s11, [#allocation4], 128, 128, 8
    $region65: #{tpu_custom_call.1} parent=1 // pred_fallthru
      _
    // Predicated region
    $region66: #{tpu_custom_call.1} parent=1 // pred_check
      _
    $region67: #{tpu_custom_call.1} parent=1 // pred_check_branch
      %878 = sbr.rel (0) target = $region69
    $region68: #{tpu_custom_call.1} parent=1 // pred_region
      %879 = dma.done [#allocation4], 2048
    $region69: #{tpu_custom_call.1} parent=1 // pred_fallthru
      _
    %880 = vsyncpa [#allocation3], 1
    %881 = vsyncpa [#allocation6], 1
    %882 = vsyncpa [#allocation9], 1
    %883 = vsyncpa [#allocation4], 1

</llo_original>
